<compile_context>
chip_gen: v6e
topology: v6e:2x2x1
jax: 0.10.0
libtpu: 0.0.40
codegen_flags: <defaults>
</compile_context>

<pallas_src>
import jax
import jax.numpy as jnp
from jax.experimental import pallas as pl
from jax.experimental.pallas import tpu as pltpu

_BN_EPS = 1e-5
_FUSED_MAX_ROWS = 1024          # padded-batch threshold for the fused single-kernel path
_FUSED_MAX_VMEM = 24 << 20
_TILE_B_CAP = 2048


def _round_up(x, m):
    return ((x + m - 1) // m) * m


def _cdiv(a, b):
    return -(-a // b)


def _pad2(a, rows, cols):
    return jnp.pad(a, ((0, rows - a.shape[0]), (0, cols - a.shape[1])))


# ---------------------------------------------------------------------------
# VMEM budget helpers (Python ints only -> static under jit)
# ---------------------------------------------------------------------------
def _weights_bytes(dp, f1p, f2p, ap):
    w = 2 * (dp * f1p + f1p * f2p + f2p * ap)     # bf16 weights
    b = 4 * (f1p + f2p + ap)                      # f32 biases
    return 2 * (w + b)                            # assume pipeline double-buffers them


def _fused_vmem_bytes(bp, dp, f1p, f2p, ap):
    io = 2 * (4 * bp * dp + 2 * bp * ap)                      # f32 in, bf16 out
    acts = bp * (6 * dp + 6 * f1p + 6 * f2p + 4 * ap)         # f32 + bf16 temporaries
    return _weights_bytes(dp, f1p, f2p, ap) + io + acts


def _tiled_vmem_bytes(tile_b, dp, f1p, f2p, ap):
    io = 2 * (2 * tile_b * dp + 2 * tile_b * ap)              # bf16 in/out tiles, x2 bufs
    stats = 4 * 4 * dp
    acts = tile_b * (6 * dp + 6 * f1p + 6 * f2p + 4 * ap)
    return _weights_bytes(dp, f1p, f2p, ap) + io + stats + acts


def _vmem_limit(need):
    return int(min(need + (4 << 20), 40 << 20))


# ---------------------------------------------------------------------------
# Kernel A (small B): fused BN-stats + normalize + 3-layer MLP, whole batch
# resident in VMEM, single grid step.
# ---------------------------------------------------------------------------
def _make_fused_kernel(batch_rows):
    inv_b = 1.0 / float(batch_rows)

    def kernel(x_ref, w1_ref, b1_ref, w2_ref, b2_ref, w3_ref, b3_ref, out_ref):
        x = x_ref[...]                                   # (bp, dp) f32, pad rows/cols are 0
        bp = x.shape[0]
        row = jax.lax.broadcasted_iota(jnp.int32, (bp, 1), 0)
        valid = (row < batch_rows).astype(jnp.float32)   # mask out zero-padded batch rows

        mean = jnp.sum(x, axis=0, keepdims=True) * inv_b
        d = (x - mean) * valid                           # two-pass (stable) variance
        var = jnp.sum(d * d, axis=0, keepdims=True) * inv_b
        xhat = d * jax.lax.rsqrt(var + _BN_EPS)          # padded cols: d == 0 -> xhat == 0

        h1 = jnp.dot(xhat.astype(jnp.bfloat16), w1_ref[...],
                     preferred_element_type=jnp.float32)
        h1 = jnp.maximum(h1 + b1_ref[...], 0.0)
        h2 = jnp.dot(h1.astype(jnp.bfloat16), w2_ref[...],
                     preferred_element_type=jnp.float32)
        h2 = jnp.maximum(h2 + b2_ref[...], 0.0)
        o = jnp.dot(h2.astype(jnp.bfloat16), w3_ref[...],
                    preferred_element_type=jnp.float32)
        out_ref[...] = jnp.tanh(o + b3_ref[...]).astype(out_ref.dtype)

    return kernel


# ---------------------------------------------------------------------------
# Kernel B (large B): batch-tiled MLP; BN mean/invstd are precomputed (f32, tiny)
# and applied per tile in-kernel.  Input/output tiles are bf16.
# ---------------------------------------------------------------------------
def actor_mlp_kernel(x_ref, mean_ref, inv_ref, w1_ref, b1_ref, w2_ref, b2_ref,
                     w3_ref, b3_ref, out_ref):
    xhat = (x_ref[...].astype(jnp.float32) - mean_ref[...]) * inv_ref[...]

    h1 = jnp.dot(xhat.astype(jnp.bfloat16), w1_ref[...],
                 preferred_element_type=jnp.float32)
    h1 = jnp.maximum(h1 + b1_ref[...], 0.0)
    h2 = jnp.dot(h1.astype(jnp.bfloat16), w2_ref[...],
                 preferred_element_type=jnp.float32)
    h2 = jnp.maximum(h2 + b2_ref[...], 0.0)
    o = jnp.dot(h2.astype(jnp.bfloat16), w3_ref[...],
                preferred_element_type=jnp.float32)
    out_ref[...] = jnp.tanh(o + b3_ref[...]).astype(out_ref.dtype)


# ---------------------------------------------------------------------------
# Forward
# ---------------------------------------------------------------------------
def _actor_forward_impl(state, pp, action_dim):
    B, _ = state.shape
    dp, f1p = pp["w1"].shape
    f2p = pp["w2"].shape[1]
    ap = pp["w3"].shape[1]
    x32 = state.astype(jnp.float32)

    const = lambda i: (0, 0)

    # ---- fused single-kernel path (latency-bound small batches) ----
    bp_small = _round_up(B, 8)
    fused_need = _fused_vmem_bytes(bp_small, dp, f1p, f2p, ap)
    if bp_small <= _FUSED_MAX_ROWS and fused_need <= _FUSED_MAX_VMEM:
        x_p = _pad2(x32, bp_small, dp)
        out_p = pl.pallas_call(
            _make_fused_kernel(B),
            out_shape=jax.ShapeDtypeStruct((bp_small, ap), jnp.bfloat16),
            grid=(1,),
            in_specs=[
                pl.BlockSpec((bp_small, dp), const),
                pl.BlockSpec((dp, f1p), const),
                pl.BlockSpec((1, f1p), const),
                pl.BlockSpec((f1p, f2p), const),
                pl.BlockSpec((1, f2p), const),
                pl.BlockSpec((f2p, ap), const),
                pl.BlockSpec((1, ap), const),
            ],
            out_specs=pl.BlockSpec((bp_small, ap), const),
            compiler_params=pltpu.CompilerParams(
                dimension_semantics=("arbitrary",),
                vmem_limit_bytes=_vmem_limit(fused_need)),
        )(x_p, pp["w1"], pp["b1"], pp["w2"], pp["b2"], pp["w3"], pp["b3"])
        return out_p[:B, :action_dim].astype(jnp.float32)

    # ---- tiled path (large batches) ----
    # >= 2 tiles so the "parallel" batch axis can feed both v7x TensorCores;
    # tile_b chosen to minimize padding, capped at 2048.
    n_tiles = max(2, _cdiv(B, _TILE_B_CAP))
    tile_b = _round_up(_cdiv(B, n_tiles), 8)
    bp = tile_b * n_tiles

    # BN statistics from the UNPADDED f32 state, two-pass (numerically stable).
    mean = jnp.mean(x32, axis=0, keepdims=True)
    var = jnp.mean((x32 - mean) ** 2, axis=0, keepdims=True)
    invstd = jax.lax.rsqrt(var + _BN_EPS)
    mean_p = _pad2(mean, 1, dp)
    invstd_p = _pad2(invstd, 1, dp)          # padded lanes: invstd = 0 -> xhat = 0
    x_p = _pad2(x32, bp, dp).astype(jnp.bfloat16)

    need = _tiled_vmem_bytes(tile_b, dp, f1p, f2p, ap)
    out_p = pl.pallas_call(
        actor_mlp_kernel,
        out_shape=jax.ShapeDtypeStruct((bp, ap), jnp.bfloat16),
        grid=(n_tiles,),
        in_specs=[
            pl.BlockSpec((tile_b, dp), lambda i: (i, 0)),
            pl.BlockSpec((1, dp), const),
            pl.BlockSpec((1, dp), const),
            pl.BlockSpec((dp, f1p), const),
            pl.BlockSpec((1, f1p), const),
            pl.BlockSpec((f1p, f2p), const),
            pl.BlockSpec((1, f2p), const),
            pl.BlockSpec((f2p, ap), const),
            pl.BlockSpec((1, ap), const),
        ],
        out_specs=pl.BlockSpec((tile_b, ap), lambda i: (i, 0)),
        compiler_params=pltpu.CompilerParams(
            dimension_semantics=("parallel",),
            vmem_limit_bytes=_vmem_limit(need)),
    )(x_p, mean_p, invstd_p, pp["w1"], pp["b1"], pp["w2"], pp["b2"],
      pp["w3"], pp["b3"])
    return out_p[:B, :action_dim].astype(jnp.float32)


_actor_forward_jit = jax.jit(_actor_forward_impl, static_argnums=(2,))


def actor_forward(state, prepared):
    """state: (B, state_dim) float array; prepared: from prepare_actor_params."""
    return _actor_forward_jit(state, prepared["arrays"], prepared["action_dim"])


# ---------------------------------------------------------------------------
# Parameter init / one-time preparation (padding + bf16 cast hoisted here)
# ---------------------------------------------------------------------------
def xavier_uniform(key, fan_in, fan_out, dtype=jnp.float32):
    limit = jnp.sqrt(6.0 / (fan_in + fan_out)).astype(dtype)
    # stored as (in, out) so kernels compute x @ W (== torch x @ W.T)
    return jax.random.uniform(key, (fan_in, fan_out), dtype, -limit, limit)


def init_actor_params(key, state_dim, action_dim, fc1_units, fc2_units):
    k1, k2, k3 = jax.random.split(key, 3)
    return {
        "w1": xavier_uniform(k1, state_dim, fc1_units),
        "b1": jnp.full((1, fc1_units), 0.01, jnp.float32),
        "w2": xavier_uniform(k2, fc1_units, fc2_units),
        "b2": jnp.full((1, fc2_units), 0.01, jnp.float32),
        "w3": xavier_uniform(k3, fc2_units, action_dim),
        "b3": jnp.full((1, action_dim), 0.01, jnp.float32),
    }


def prepare_actor_params(params):
    """Pad feature dims to multiples of 128 and cast weights to bf16, once."""
    state_dim, fc1_units = params["w1"].shape
    fc2_units = params["w2"].shape[1]
    action_dim = params["w3"].shape[1]
    dp = _round_up(state_dim, 128)
    f1p = _round_up(fc1_units, 128)
    f2p = _round_up(fc2_units, 128)
    ap = _round_up(action_dim, 128)
    arrays = {
        "w1": _pad2(params["w1"].astype(jnp.float32), dp, f1p).astype(jnp.bfloat16),
        "b1": _pad2(params["b1"].astype(jnp.float32).reshape(1, -1), 1, f1p),
        "w2": _pad2(params["w2"].astype(jnp.float32), f1p, f2p).astype(jnp.bfloat16),
        "b2": _pad2(params["b2"].astype(jnp.float32).reshape(1, -1), 1, f2p),
        "w3": _pad2(params["w3"].astype(jnp.float32), f2p, ap).astype(jnp.bfloat16),
        "b3": _pad2(params["b3"].astype(jnp.float32).reshape(1, -1), 1, ap),
    }
    return {"arrays": arrays, "action_dim": action_dim}


if __name__ == "__main__":
    # small shapes consistent with Actor(state_dim, action_dim, fc1, fc2, seed)
    B, state_dim, action_dim, fc1_units, fc2_units = 12, 16, 4, 32, 32

    key = jax.random.PRNGKey(0)
    k_state, k_params, k_state2 = jax.random.split(key, 3)
    params = init_actor_params(k_params, state_dim, action_dim, fc1_units,
                               fc2_units)
    prepared = prepare_actor_params(params)

    def reference(x):
        # pure-JAX f32 reference (PyTorch train-mode BatchNorm1d forward semantics)
        mean = jnp.mean(x, axis=0, keepdims=True)
        var = jnp.mean((x - mean) ** 2, axis=0, keepdims=True)
        xhat = (x - mean) / jnp.sqrt(var + _BN_EPS)
        h1 = jnp.maximum(xhat @ params["w1"] + params["b1"], 0.0)
        h2 = jnp.maximum(h1 @ params["w2"] + params["b2"], 0.0)
        return jnp.tanh(h2 @ params["w3"] + params["b3"])

    # --- small batch: fused single-kernel path (exercises batch padding too) ---
    state = jax.random.normal(k_state, (B, state_dim), jnp.float32)
    out = actor_forward(state, prepared)
    jax.block_until_ready(out)
    ref = reference(state)
    assert out.shape == (B, action_dim)
    assert bool(jnp.all(jnp.isfinite(out)))
    err = float(jnp.max(jnp.abs(out - ref)))
    assert err < 4e-2, err          # bf16 MXU operands, f32 accumulation

    # --- larger batch: tiled path (parallel batch grid, bf16 I/O tiles) ---
    B2 = 1052
    state2 = jax.random.normal(k_state2, (B2, state_dim), jnp.float32)
    out2 = actor_forward(state2, prepared)
    jax.block_until_ready(out2)
    ref2 = reference(state2)
    assert out2.shape == (B2, action_dim)
    assert bool(jnp.all(jnp.isfinite(out2)))
    err2 = float(jnp.max(jnp.abs(out2 - ref2)))
    assert err2 < 8e-2, err2        # bf16 input tile + bf16 MXU operands

    print("KERNEL_OK")
</pallas_src>

<mosaic_0001>
module attributes {stable_mosaic.version = 11 : i64} {
  func.func @kernel(%arg0: i32, %arg1: memref<16x128xf32, #tpu.memory_space<vmem>>, %arg2: memref<128x128xbf16, #tpu.memory_space<vmem>>, %arg3: memref<1x128xf32, #tpu.memory_space<vmem>>, %arg4: memref<128x128xbf16, #tpu.memory_space<vmem>>, %arg5: memref<1x128xf32, #tpu.memory_space<vmem>>, %arg6: memref<128x128xbf16, #tpu.memory_space<vmem>>, %arg7: memref<1x128xf32, #tpu.memory_space<vmem>>, %arg8: memref<16x128xbf16, #tpu.memory_space<vmem>>) attributes {dimension_semantics = [#tpu.dimension_semantics<arbitrary>], iteration_bounds = array<i64: 1>, scalar_prefetch = 0 : i64, scratch_operands = 0 : i64, tpu.core_type = #tpu.core_type<tc>, window_params = [{pipeline_mode = #tpu.pipeline_mode<synchronous>, transform_indices = @transform_0, window_bounds = array<i64: 16, 128>}, {pipeline_mode = #tpu.pipeline_mode<synchronous>, transform_indices = @transform_1, window_bounds = array<i64: 128, 128>}, {pipeline_mode = #tpu.pipeline_mode<synchronous>, transform_indices = @transform_2, window_bounds = array<i64: 1, 128>}, {pipeline_mode = #tpu.pipeline_mode<synchronous>, transform_indices = @transform_3, window_bounds = array<i64: 128, 128>}, {pipeline_mode = #tpu.pipeline_mode<synchronous>, transform_indices = @transform_4, window_bounds = array<i64: 1, 128>}, {pipeline_mode = #tpu.pipeline_mode<synchronous>, transform_indices = @transform_5, window_bounds = array<i64: 128, 128>}, {pipeline_mode = #tpu.pipeline_mode<synchronous>, transform_indices = @transform_6, window_bounds = array<i64: 1, 128>}, {pipeline_mode = #tpu.pipeline_mode<synchronous>, transform_indices = @transform_7, window_bounds = array<i64: 16, 128>}]} {
    %c0 = arith.constant 0 : index
    %c0_0 = arith.constant 0 : index
    %0 = vector.load %arg1[%c0, %c0_0] : memref<16x128xf32, #tpu.memory_space<vmem>>, vector<16x128xf32>
    %1 = tpu.iota {dimensions = array<i32: 0>} : vector<16x1xi32>
    %c12_i32 = arith.constant 12 : i32
    %2 = vector.broadcast %c12_i32 : i32 to vector<16x1xi32>
    %3 = arith.cmpi slt, %1, %2 : vector<16x1xi32>
    %4 = arith.extui %3 : vector<16x1xi1> to vector<16x1xi32>
    %5 = arith.sitofp %4 : vector<16x1xi32> to vector<16x1xf32>
    %cst = arith.constant dense<0.000000e+00> : vector<128xf32>
    %6 = vector.multi_reduction <add>, %0, %cst [0] : vector<16x128xf32> to vector<128xf32>
    %7 = vector.shape_cast %6 : vector<128xf32> to vector<1x128xf32>
    %cst_1 = arith.constant 0.0833333358 : f32
    %8 = vector.broadcast %cst_1 : f32 to vector<1x128xf32>
    %9 = arith.mulf %7, %8 : vector<1x128xf32>
    %10 = vector.broadcast %9 : vector<1x128xf32> to vector<16x128xf32>
    %11 = arith.subf %0, %10 : vector<16x128xf32>
    %12 = vector.broadcast %5 : vector<16x1xf32> to vector<16x128xf32>
    %13 = arith.mulf %11, %12 : vector<16x128xf32>
    %14 = arith.mulf %13, %13 : vector<16x128xf32>
    %cst_2 = arith.constant dense<0.000000e+00> : vector<128xf32>
    %15 = vector.multi_reduction <add>, %14, %cst_2 [0] : vector<16x128xf32> to vector<128xf32>
    %16 = vector.shape_cast %15 : vector<128xf32> to vector<1x128xf32>
    %cst_3 = arith.constant 0.0833333358 : f32
    %17 = vector.broadcast %cst_3 : f32 to vector<1x128xf32>
    %18 = arith.mulf %16, %17 : vector<1x128xf32>
    %cst_4 = arith.constant 9.99999974E-6 : f32
    %19 = vector.broadcast %cst_4 : f32 to vector<1x128xf32>
    %20 = arith.addf %18, %19 : vector<1x128xf32>
    %21 = math.rsqrt %20 : vector<1x128xf32>
    %22 = vector.broadcast %21 : vector<1x128xf32> to vector<16x128xf32>
    %23 = arith.mulf %13, %22 : vector<16x128xf32>
    %24 = arith.truncf %23 : vector<16x128xf32> to vector<16x128xbf16>
    %c0_5 = arith.constant 0 : index
    %c0_6 = arith.constant 0 : index
    %25 = vector.load %arg2[%c0_5, %c0_6] : memref<128x128xbf16, #tpu.memory_space<vmem>>, vector<128x128xbf16>
    %cst_7 = arith.constant dense<0.000000e+00> : vector<16x128xf32>
    %26 = tpu.matmul %24, %25, %cst_7 {dimension_numbers = #tpu.dot_dimension_numbers<[1], [0], [0], [1], [0, 0, 1, 1], [], []>} : vector<16x128xbf16>, vector<128x128xbf16>, vector<16x128xf32> -> vector<16x128xf32>
    %c0_8 = arith.constant 0 : index
    %c0_9 = arith.constant 0 : index
    %27 = vector.load %arg3[%c0_8, %c0_9] : memref<1x128xf32, #tpu.memory_space<vmem>>, vector<1x128xf32>
    %28 = vector.broadcast %27 : vector<1x128xf32> to vector<16x128xf32>
    %29 = arith.addf %26, %28 : vector<16x128xf32>
    %cst_10 = arith.constant 0.000000e+00 : f32
    %30 = vector.broadcast %cst_10 : f32 to vector<16x128xf32>
    %31 = arith.maximumf %29, %30 : vector<16x128xf32>
    %32 = arith.truncf %31 : vector<16x128xf32> to vector<16x128xbf16>
    %c0_11 = arith.constant 0 : index
    %c0_12 = arith.constant 0 : index
    %33 = vector.load %arg4[%c0_11, %c0_12] : memref<128x128xbf16, #tpu.memory_space<vmem>>, vector<128x128xbf16>
    %cst_13 = arith.constant dense<0.000000e+00> : vector<16x128xf32>
    %34 = tpu.matmul %32, %33, %cst_13 {dimension_numbers = #tpu.dot_dimension_numbers<[1], [0], [0], [1], [0, 0, 1, 1], [], []>} : vector<16x128xbf16>, vector<128x128xbf16>, vector<16x128xf32> -> vector<16x128xf32>
    %c0_14 = arith.constant 0 : index
    %c0_15 = arith.constant 0 : index
    %35 = vector.load %arg5[%c0_14, %c0_15] : memref<1x128xf32, #tpu.memory_space<vmem>>, vector<1x128xf32>
    %36 = vector.broadcast %35 : vector<1x128xf32> to vector<16x128xf32>
    %37 = arith.addf %34, %36 : vector<16x128xf32>
    %cst_16 = arith.constant 0.000000e+00 : f32
    %38 = vector.broadcast %cst_16 : f32 to vector<16x128xf32>
    %39 = arith.maximumf %37, %38 : vector<16x128xf32>
    %40 = arith.truncf %39 : vector<16x128xf32> to vector<16x128xbf16>
    %c0_17 = arith.constant 0 : index
    %c0_18 = arith.constant 0 : index
    %41 = vector.load %arg6[%c0_17, %c0_18] : memref<128x128xbf16, #tpu.memory_space<vmem>>, vector<128x128xbf16>
    %cst_19 = arith.constant dense<0.000000e+00> : vector<16x128xf32>
    %42 = tpu.matmul %40, %41, %cst_19 {dimension_numbers = #tpu.dot_dimension_numbers<[1], [0], [0], [1], [0, 0, 1, 1], [], []>} : vector<16x128xbf16>, vector<128x128xbf16>, vector<16x128xf32> -> vector<16x128xf32>
    %c0_20 = arith.constant 0 : index
    %c0_21 = arith.constant 0 : index
    %43 = vector.load %arg7[%c0_20, %c0_21] : memref<1x128xf32, #tpu.memory_space<vmem>>, vector<1x128xf32>
    %44 = vector.broadcast %43 : vector<1x128xf32> to vector<16x128xf32>
    %45 = arith.addf %42, %44 : vector<16x128xf32>
    %46 = math.tanh %45 : vector<16x128xf32>
    %47 = arith.truncf %46 : vector<16x128xf32> to vector<16x128xbf16>
    %c0_22 = arith.constant 0 : index
    %c0_23 = arith.constant 0 : index
    %48 = vector.load %arg8[%c0_22, %c0_23] : memref<16x128xbf16, #tpu.memory_space<vmem>>, vector<16x128xbf16>
    tpu.vector_store %arg8[%c0_22, %c0_23], %47 {strides = array<i32>} : memref<16x128xbf16, #tpu.memory_space<vmem>>, vector<16x128xbf16>,
    return
  }
  func.func @transform_0(%arg0: i32) -> (i32, i32) {
    %c0_i32 = arith.constant 0 : i32
    %c0_i32_0 = arith.constant 0 : i32
    %c0_i32_1 = arith.constant 0 : i32
    return %c0_i32, %c0_i32_0 : i32, i32
  }
  func.func @transform_1(%arg0: i32) -> (i32, i32) {
    %c0_i32 = arith.constant 0 : i32
    %c0_i32_0 = arith.constant 0 : i32
    %c0_i32_1 = arith.constant 0 : i32
    return %c0_i32, %c0_i32_0 : i32, i32
  }
  func.func @transform_2(%arg0: i32) -> (i32, i32) {
    %c0_i32 = arith.constant 0 : i32
    %c0_i32_0 = arith.constant 0 : i32
    %c0_i32_1 = arith.constant 0 : i32
    return %c0_i32, %c0_i32_0 : i32, i32
  }
  func.func @transform_3(%arg0: i32) -> (i32, i32) {
    %c0_i32 = arith.constant 0 : i32
    %c0_i32_0 = arith.constant 0 : i32
    %c0_i32_1 = arith.constant 0 : i32
    return %c0_i32, %c0_i32_0 : i32, i32
  }
  func.func @transform_4(%arg0: i32) -> (i32, i32) {
    %c0_i32 = arith.constant 0 : i32
    %c0_i32_0 = arith.constant 0 : i32
    %c0_i32_1 = arith.constant 0 : i32
    return %c0_i32, %c0_i32_0 : i32, i32
  }
  func.func @transform_5(%arg0: i32) -> (i32, i32) {
    %c0_i32 = arith.constant 0 : i32
    %c0_i32_0 = arith.constant 0 : i32
    %c0_i32_1 = arith.constant 0 : i32
    return %c0_i32, %c0_i32_0 : i32, i32
  }
  func.func @transform_6(%arg0: i32) -> (i32, i32) {
    %c0_i32 = arith.constant 0 : i32
    %c0_i32_0 = arith.constant 0 : i32
    %c0_i32_1 = arith.constant 0 : i32
    return %c0_i32, %c0_i32_0 : i32, i32
  }
  func.func @transform_7(%arg0: i32) -> (i32, i32) {
    %c0_i32 = arith.constant 0 : i32
    %c0_i32_0 = arith.constant 0 : i32
    %c0_i32_1 = arith.constant 0 : i32
    return %c0_i32, %c0_i32_0 : i32, i32
  }
}

</mosaic_0001>

<llo_original>
// kernel: _actor_forward_impl.1
$region0: #{_actor_forward_impl.1}
  #allocation0 [shape = 'u32[]', space=smem, size = 0x4, offset = 0x4, fixed_abs, tag = 'smem constant byte address 0x4 - core index']
  #allocation1 [shape = 'u32[144,128]{1,0:T(1,128)}', space=vmem, size = 0x12000, scoped, tag = 'internal scratch']
  %s0 = inlined_call_operand.vmem [shape: f32[16,128], index: 0, kind: input, shape index: {}]
  %s1 = inlined_call_operand.hbm [shape: bf16[128,128], index: 1, kind: input, shape index: {}]
  %s2 = inlined_call_operand.vmem [shape: f32[1,128], index: 2, kind: input, shape index: {}]
  %s3 = inlined_call_operand.hbm [shape: bf16[128,128], index: 3, kind: input, shape index: {}]
  %s4 = inlined_call_operand.vmem [shape: f32[1,128], index: 4, kind: input, shape index: {}]
  %s5 = inlined_call_operand.hbm [shape: bf16[128,128], index: 5, kind: input, shape index: {}]
  %s6 = inlined_call_operand.vmem [shape: f32[1,128], index: 6, kind: input, shape index: {}]
  %s7 = inlined_call_operand.vmem [shape: bf16[16,128], index: 7, kind: output, shape index: {}]
  %s8 = sld [smem:[#allocation0]]
  $region50: #{_actor_forward_impl.1} parent=0
    _
  %s10 = ssub.s32 1, %s8
  %s11 = scalar_select 0, %s10, %s8
  $region1: #{_actor_forward_impl.1} parent=0
    #allocation2 [shape = 'u8[32768]{0}', space=vmem, size = 0x8000, scoped, tag = 'input window, operand 1, single buffered']
    #allocation3 [shape = 's32[1]{0}', space=sflag, size = 0x4, scoped, tag = 'scoped memory for _actor_forward_impl.1']
    #allocation4 [shape = 'u8[32768]{0}', space=vmem, size = 0x8000, scoped, tag = 'input window, operand 3, single buffered']
    #allocation5 [shape = 's32[1]{0}', space=sflag, size = 0x4, scoped, tag = 'scoped memory for _actor_forward_impl.1']
    #allocation6 [shape = 'u8[32768]{0}', space=vmem, size = 0x8000, scoped, tag = 'input window, operand 5, single buffered']
    %12 = vsyncpa [#allocation3], 0
    %13 = vsyncpa [#allocation5], 0
    // Predicated region
    $region2: #{_actor_forward_impl.1} parent=1 // pred_check
      _
    $region3: #{_actor_forward_impl.1} parent=1 // pred_check_branch
      %15 = sbr.rel (0) target = $region5
    $region4: #{_actor_forward_impl.1} parent=1 // pred_region
      _
    $region5: #{_actor_forward_impl.1} parent=1 // pred_fallthru
      _
    // Predicated region
    $region6: #{_actor_forward_impl.1} parent=1 // pred_check
      _
    $region7: #{_actor_forward_impl.1} parent=1 // pred_check_branch
      %17 = sbr.rel (0) target = $region9
    $region8: #{_actor_forward_impl.1} parent=1 // pred_region
      %s19 = ssub.s32 1024, 1024
      %20 = vsyncadd [#allocation3], %s19
      %s21 = sshll.u32 [#allocation2], 4
      %s22 = int_to_ptr.vmem [resolvable:$true] %s21
      %27 = dma.hbm_to_vmem [thread:$0]  %s1, 1024, %s22, [#allocation3], 64, 64, 4
    $region9: #{_actor_forward_impl.1} parent=1 // pred_fallthru
      _
    // Predicated region
    $region10: #{_actor_forward_impl.1} parent=1 // pred_check
      _
    $region11: #{_actor_forward_impl.1} parent=1 // pred_check_branch
      %29 = sbr.rel (0) target = $region13
    $region12: #{_actor_forward_impl.1} parent=1 // pred_region
      _
    $region13: #{_actor_forward_impl.1} parent=1 // pred_fallthru
      _
    // Predicated region
    $region14: #{_actor_forward_impl.1} parent=1 // pred_check
      _
    $region15: #{_actor_forward_impl.1} parent=1 // pred_check_branch
      %31 = sbr.rel (0) target = $region17
    $region16: #{_actor_forward_impl.1} parent=1 // pred_region
      %s33 = ssub.s32 1024, 1024
      %34 = vsyncadd [#allocation5], %s33
      %s35 = sshll.u32 [#allocation4], 4
      %s36 = int_to_ptr.vmem [resolvable:$true] %s35
      %41 = dma.hbm_to_vmem [thread:$0]  %s3, 1024, %s36, [#allocation5], 64, 64, 4
    $region17: #{_actor_forward_impl.1} parent=1 // pred_fallthru
      _
    // Predicated region
    $region18: #{_actor_forward_impl.1} parent=1 // pred_check
      _
    $region19: #{_actor_forward_impl.1} parent=1 // pred_check_branch
      %43 = sbr.rel (0) target = $region21
    $region20: #{_actor_forward_impl.1} parent=1 // pred_region
      _
    $region21: #{_actor_forward_impl.1} parent=1 // pred_fallthru
      _
    // Predicated region
    $region22: #{_actor_forward_impl.1} parent=1 // pred_check
      _
    $region23: #{_actor_forward_impl.1} parent=1 // pred_check_branch
      %45 = sbr.rel (0) target = $region25
    $region24: #{_actor_forward_impl.1} parent=1 // pred_region
      %s47 = ssub.s32 1024, 1024
      %48 = vsyncadd [#allocation5], %s47
      %s49 = sshll.u32 [#allocation6], 4
      %s50 = int_to_ptr.vmem [resolvable:$true] %s49
      %55 = dma.hbm_to_vmem [thread:$0]  %s5, 1024, %s50, [#allocation5], 64, 64, 4
    $region25: #{_actor_forward_impl.1} parent=1 // pred_fallthru
      _
    // Predicated region
    $region26: #{_actor_forward_impl.1} parent=1 // pred_check
      _
    $region27: #{_actor_forward_impl.1} parent=1 // pred_check_branch
      %57 = sbr.rel (0) target = $region29
    $region28: #{_actor_forward_impl.1} parent=1 // pred_region
      _
    $region29: #{_actor_forward_impl.1} parent=1 // pred_fallthru
      _
    // Predicated region
    $region30: #{_actor_forward_impl.1} parent=1 // pred_check
      _
    $region31: #{_actor_forward_impl.1} parent=1 // pred_check_branch
      %59 = sbr.rel (0) target = $region33
    $region32: #{_actor_forward_impl.1} parent=1 // pred_region
      %60 = dma.done [#allocation3], 1024
    $region33: #{_actor_forward_impl.1} parent=1 // pred_fallthru
      _
    // Predicated region
    $region34: #{_actor_forward_impl.1} parent=1 // pred_check
      _
    $region35: #{_actor_forward_impl.1} parent=1 // pred_check_branch
      %62 = sbr.rel (0) target = $region37
    $region36: #{_actor_forward_impl.1} parent=1 // pred_region
      %63 = dma.done [#allocation5], 1024
    $region37: #{_actor_forward_impl.1} parent=1 // pred_fallthru
      _
    // Predicated region
    $region38: #{_actor_forward_impl.1} parent=1 // pred_check
      _
    $region39: #{_actor_forward_impl.1} parent=1 // pred_check_branch
      %65 = sbr.rel (0) target = $region41
    $region40: #{_actor_forward_impl.1} parent=1 // pred_region
      %66 = dma.done [#allocation5], 1024
    $region41: #{_actor_forward_impl.1} parent=1 // pred_fallthru
      _
    %v68 = vld [vmem:[%s0] sm:$0xff]
    %v69 = vld [vmem:[%s0 + $0x8] sm:$0xff]
    %v70 = vlaneseq
    %v71 = vshrl.u32 %v70, 7
    %v72 = vadd.s32 %v71, 8
    %vm73 = vcmp.lt.s32.totalorder %v71, 12
    %vm74 = vcmp.lt.s32.totalorder %v72, 12
    %v75 = vsel %vm73, 1, 0
    %v76 = vsel %vm74, 1, 0
    %v77 = vcvt.s32.f32 %v75
    %v78 = vcvt.s32.f32 %v76
    %v79 = vadd.f32 %v68, %v69
    %v80 = vrot.slane %v79, 4
    %v81 = vadd.f32 %v79, %v80
    %v82 = vrot.slane %v81, 2
    %v83 = vadd.f32 %v81, %v82
    %v84 = vrot.slane %v83, 1
    %v85 = vadd.f32 %v83, %v84
    %v86 = vmul.f32 %v85, 0.083333336
    %v87 = vsub.f32 %v68, %v86
    %v88 = vsub.f32 %v69, %v86
    %v89 = vmul.f32 %v87, %v77
    %v90 = vmul.f32 %v88, %v78
    %v91 = vmul.f32 %v89, %v89
    %v92 = vmul.f32 %v90, %v90
    %v93 = vadd.f32 %v91, %v92
    %v94 = vrot.slane %v93, 4
    %v95 = vadd.f32 %v93, %v94
    %v96 = vrot.slane %v95, 2
    %v97 = vadd.f32 %v95, %v96
    %v98 = vrot.slane %v97, 1
    %v99 = vadd.f32 %v97, %v98
    %v100 = vmul.f32 %v99, 0.083333336
    %v101 = vadd.f32 %v100, 1e-05
    %v102 = vrsqrt.pop %v101
    %v103 = vmul.f32 %v89, %v102
    %v104 = vmul.f32 %v90, %v102
    %v105 = vpack.c.bf16 %v104, %v103
    %v106 = vld [vmem:[#allocation2] sm:$0xf]
    %v107 = vld [vmem:[#allocation2 + $0x4] sm:$0xf]
    %v108 = vld [vmem:[#allocation2 + $0x8] sm:$0xf]
    %v109 = vld [vmem:[#allocation2 + $0xc] sm:$0xf]
    %v110 = vld [vmem:[#allocation2 + $0x10] sm:$0xf]
    %v111 = vld [vmem:[#allocation2 + $0x14] sm:$0xf]
    %v112 = vld [vmem:[#allocation2 + $0x18] sm:$0xf]
    %v113 = vld [vmem:[#allocation2 + $0x1c] sm:$0xf]
    %v114 = vld [vmem:[#allocation2 + $0x20] sm:$0xf]
    %v115 = vld [vmem:[#allocation2 + $0x24] sm:$0xf]
    %v116 = vld [vmem:[#allocation2 + $0x28] sm:$0xf]
    %v117 = vld [vmem:[#allocation2 + $0x2c] sm:$0xf]
    %v118 = vld [vmem:[#allocation2 + $0x30] sm:$0xf]
    %v119 = vld [vmem:[#allocation2 + $0x34] sm:$0xf]
    %v120 = vld [vmem:[#allocation2 + $0x38] sm:$0xf]
    %v121 = vld [vmem:[#allocation2 + $0x3c] sm:$0xf]
    %v122 = vld [vmem:[%s2] sm:$0x1]
    %v124 = vlaneseq
    %v125 = vshrl.u32 %v124, 7
    %v126 = vsub.s32 0, %v125
    %v127 = vrot.slane %v122, %v126
    %v145 = vunpack.c.l.b16 %v106
    %v146 = vunpack.c.l.b16 %v107
    %v147 = vunpack.c.l.b16 %v108
    %v148 = vunpack.c.l.b16 %v109
    %v149 = vunpack.c.l.b16 %v110
    %v150 = vunpack.c.l.b16 %v111
    %v151 = vunpack.c.l.b16 %v112
    %v152 = vunpack.c.l.b16 %v113
    %v153 = vunpack.c.l.b16 %v114
    %v154 = vunpack.c.l.b16 %v115
    %v155 = vunpack.c.l.b16 %v116
    %v156 = vunpack.c.l.b16 %v117
    %v157 = vunpack.c.l.b16 %v118
    %v158 = vunpack.c.l.b16 %v119
    %v159 = vunpack.c.l.b16 %v120
    %v160 = vunpack.c.l.b16 %v121
    %v161 = vpack.c.b16 %v146, %v145
    %v162 = vpack.c.b16 %v148, %v147
    %v163 = vpack.c.b16 %v150, %v149
    %v164 = vpack.c.b16 %v152, %v151
    %v165 = vpack.c.b16 %v154, %v153
    %v166 = vpack.c.b16 %v156, %v155
    %v167 = vpack.c.b16 %v158, %v157
    %v168 = vpack.c.b16 %v160, %v159
    %177 = vmatprep.subr.bf16.mxu0 0
    %178 = vmatpush1.bf16.msra.mxu0 %v168
    %179 = vmatprep.subr.bf16.mxu0 0
    %180 = vmatpush1.bf16.msra.mxu0 %v167
    %181 = vmatprep.subr.bf16.mxu0 0
    %182 = vmatpush1.bf16.msra.mxu0 %v166
    %183 = vmatprep.subr.bf16.mxu0 0
    %184 = vmatpush1.bf16.msra.mxu0 %v165
    %185 = vmatprep.subr.bf16.mxu0 0
    %186 = vmatpush1.bf16.msra.mxu0 %v164
    %187 = vmatprep.subr.bf16.mxu0 0
    %188 = vmatpush1.bf16.msra.mxu0 %v163
    %189 = vmatprep.subr.bf16.mxu0 0
    %190 = vmatpush1.bf16.msra.mxu0 %v162
    %191 = vmatprep.subr.bf16.mxu0 0
    %192 = vmatpush1.bf16.msra.mxu0 %v161
    %193 = vmatprep.subr.bf16.mxu0 0
    %194 = vmatpush2.bf16.msra.mxu0 0
    %195 = vmatprep.subr.bf16.mxu0 0
    %196 = vmatpush2.bf16.msra.mxu0 0
    %197 = vmatprep.subr.bf16.mxu0 0
    %198 = vmatpush2.bf16.msra.mxu0 0
    %199 = vmatprep.subr.bf16.mxu0 0
    %200 = vmatpush2.bf16.msra.mxu0 0
    %201 = vmatprep.subr.bf16.mxu0 0
    %202 = vmatpush2.bf16.msra.mxu0 0
    %203 = vmatprep.subr.bf16.mxu0 0
    %204 = vmatpush2.bf16.msra.mxu0 0
    %205 = vmatprep.subr.bf16.mxu0 0
    %206 = vmatpush2.bf16.msra.mxu0 0
    %207 = vmatprep.subr.bf16.mxu0 0
    %208 = vmatpush2.bf16.msra.mxu0 0
    %209 = vmatprep.mubr.bf16.mxu0 0
    %210 = vmatmul.mubr.bf16.gmra.mxu0 %v105
    %v211 = vpop.f32.mrf.mxu0
    %v212 = vadd.f32 %v127, %v211
    %v213 = vpop.f32.mrf.mxu0
    %v214 = vpop.f32.mrf.mxu0
    %v215 = vadd.f32 %v127, %v214
    %v216 = vpop.f32.mrf.mxu0
    %217 = vdwg.mxu0
    %v218 = vmax.f32 %v212, 0.0
    %v219 = vmax.f32 %v215, 0.0
    %v220 = vpack.c.bf16 %v219, %v218
    %v221 = vld [vmem:[#allocation4] sm:$0xf]
    %v222 = vld [vmem:[#allocation4 + $0x4] sm:$0xf]
    %v223 = vld [vmem:[#allocation4 + $0x8] sm:$0xf]
    %v224 = vld [vmem:[#allocation4 + $0xc] sm:$0xf]
    %v225 = vld [vmem:[#allocation4 + $0x10] sm:$0xf]
    %v226 = vld [vmem:[#allocation4 + $0x14] sm:$0xf]
    %v227 = vld [vmem:[#allocation4 + $0x18] sm:$0xf]
    %v228 = vld [vmem:[#allocation4 + $0x1c] sm:$0xf]
    %v229 = vld [vmem:[#allocation4 + $0x20] sm:$0xf]
    %v230 = vld [vmem:[#allocation4 + $0x24] sm:$0xf]
    %v231 = vld [vmem:[#allocation4 + $0x28] sm:$0xf]
    %v232 = vld [vmem:[#allocation4 + $0x2c] sm:$0xf]
    %v233 = vld [vmem:[#allocation4 + $0x30] sm:$0xf]
    %v234 = vld [vmem:[#allocation4 + $0x34] sm:$0xf]
    %v235 = vld [vmem:[#allocation4 + $0x38] sm:$0xf]
    %v236 = vld [vmem:[#allocation4 + $0x3c] sm:$0xf]
    %v237 = vld [vmem:[%s4] sm:$0x1]
    %v239 = vlaneseq
    %v240 = vshrl.u32 %v239, 7
    %v241 = vsub.s32 0, %v240
    %v242 = vrot.slane %v237, %v241
    %v260 = vunpack.c.l.b16 %v221
    %v261 = vunpack.c.l.b16 %v222
    %v262 = vunpack.c.l.b16 %v223
    %v263 = vunpack.c.l.b16 %v224
    %v264 = vunpack.c.l.b16 %v225
    %v265 = vunpack.c.l.b16 %v226
    %v266 = vunpack.c.l.b16 %v227
    %v267 = vunpack.c.l.b16 %v228
    %v268 = vunpack.c.l.b16 %v229
    %v269 = vunpack.c.l.b16 %v230
    %v270 = vunpack.c.l.b16 %v231
    %v271 = vunpack.c.l.b16 %v232
    %v272 = vunpack.c.l.b16 %v233
    %v273 = vunpack.c.l.b16 %v234
    %v274 = vunpack.c.l.b16 %v235
    %v275 = vunpack.c.l.b16 %v236
    %v276 = vpack.c.b16 %v261, %v260
    %v277 = vpack.c.b16 %v263, %v262
    %v278 = vpack.c.b16 %v265, %v264
    %v279 = vpack.c.b16 %v267, %v266
    %v280 = vpack.c.b16 %v269, %v268
    %v281 = vpack.c.b16 %v271, %v270
    %v282 = vpack.c.b16 %v273, %v272
    %v283 = vpack.c.b16 %v275, %v274
    %292 = vmatprep.subr.bf16.mxu0 0
    %293 = vmatpush1.bf16.msra.mxu0 %v283
    %294 = vmatprep.subr.bf16.mxu0 0
    %295 = vmatpush1.bf16.msra.mxu0 %v282
    %296 = vmatprep.subr.bf16.mxu0 0
    %297 = vmatpush1.bf16.msra.mxu0 %v281
    %298 = vmatprep.subr.bf16.mxu0 0
    %299 = vmatpush1.bf16.msra.mxu0 %v280
    %300 = vmatprep.subr.bf16.mxu0 0
    %301 = vmatpush1.bf16.msra.mxu0 %v279
    %302 = vmatprep.subr.bf16.mxu0 0
    %303 = vmatpush1.bf16.msra.mxu0 %v278
    %304 = vmatprep.subr.bf16.mxu0 0
    %305 = vmatpush1.bf16.msra.mxu0 %v277
    %306 = vmatprep.subr.bf16.mxu0 0
    %307 = vmatpush1.bf16.msra.mxu0 %v276
    %308 = vmatprep.subr.bf16.mxu0 0
    %309 = vmatpush2.bf16.msra.mxu0 0
    %310 = vmatprep.subr.bf16.mxu0 0
    %311 = vmatpush2.bf16.msra.mxu0 0
    %312 = vmatprep.subr.bf16.mxu0 0
    %313 = vmatpush2.bf16.msra.mxu0 0
    %314 = vmatprep.subr.bf16.mxu0 0
    %315 = vmatpush2.bf16.msra.mxu0 0
    %316 = vmatprep.subr.bf16.mxu0 0
    %317 = vmatpush2.bf16.msra.mxu0 0
    %318 = vmatprep.subr.bf16.mxu0 0
    %319 = vmatpush2.bf16.msra.mxu0 0
    %320 = vmatprep.subr.bf16.mxu0 0
    %321 = vmatpush2.bf16.msra.mxu0 0
    %322 = vmatprep.subr.bf16.mxu0 0
    %323 = vmatpush2.bf16.msra.mxu0 0
    %324 = vmatprep.mubr.bf16.mxu0 0
    %325 = vmatmul.mubr.bf16.gmra.mxu0 %v220
    %v326 = vpop.f32.mrf.mxu0
    %v327 = vadd.f32 %v242, %v326
    %v328 = vpop.f32.mrf.mxu0
    %v329 = vpop.f32.mrf.mxu0
    %v330 = vadd.f32 %v242, %v329
    %v331 = vpop.f32.mrf.mxu0
    %332 = vdwg.mxu0
    %v333 = vmax.f32 %v327, 0.0
    %v334 = vmax.f32 %v330, 0.0
    %v335 = vpack.c.bf16 %v334, %v333
    %v336 = vld [vmem:[#allocation6] sm:$0xf]
    %v337 = vld [vmem:[#allocation6 + $0x4] sm:$0xf]
    %v338 = vld [vmem:[#allocation6 + $0x8] sm:$0xf]
    %v339 = vld [vmem:[#allocation6 + $0xc] sm:$0xf]
    %v340 = vld [vmem:[#allocation6 + $0x10] sm:$0xf]
    %v341 = vld [vmem:[#allocation6 + $0x14] sm:$0xf]
    %v342 = vld [vmem:[#allocation6 + $0x18] sm:$0xf]
    %v343 = vld [vmem:[#allocation6 + $0x1c] sm:$0xf]
    %v344 = vld [vmem:[#allocation6 + $0x20] sm:$0xf]
    %v345 = vld [vmem:[#allocation6 + $0x24] sm:$0xf]
    %v346 = vld [vmem:[#allocation6 + $0x28] sm:$0xf]
    %v347 = vld [vmem:[#allocation6 + $0x2c] sm:$0xf]
    %v348 = vld [vmem:[#allocation6 + $0x30] sm:$0xf]
    %v349 = vld [vmem:[#allocation6 + $0x34] sm:$0xf]
    %v350 = vld [vmem:[#allocation6 + $0x38] sm:$0xf]
    %v351 = vld [vmem:[#allocation6 + $0x3c] sm:$0xf]
    %v352 = vld [vmem:[%s6] sm:$0x1]
    %v354 = vlaneseq
    %v355 = vshrl.u32 %v354, 7
    %v356 = vsub.s32 0, %v355
    %v357 = vrot.slane %v352, %v356
    %v375 = vunpack.c.l.b16 %v336
    %v376 = vunpack.c.l.b16 %v337
    %v377 = vunpack.c.l.b16 %v338
    %v378 = vunpack.c.l.b16 %v339
    %v379 = vunpack.c.l.b16 %v340
    %v380 = vunpack.c.l.b16 %v341
    %v381 = vunpack.c.l.b16 %v342
    %v382 = vunpack.c.l.b16 %v343
    %v383 = vunpack.c.l.b16 %v344
    %v384 = vunpack.c.l.b16 %v345
    %v385 = vunpack.c.l.b16 %v346
    %v386 = vunpack.c.l.b16 %v347
    %v387 = vunpack.c.l.b16 %v348
    %v388 = vunpack.c.l.b16 %v349
    %v389 = vunpack.c.l.b16 %v350
    %v390 = vunpack.c.l.b16 %v351
    %v391 = vpack.c.b16 %v376, %v375
    %v392 = vpack.c.b16 %v378, %v377
    %v393 = vpack.c.b16 %v380, %v379
    %v394 = vpack.c.b16 %v382, %v381
    %v395 = vpack.c.b16 %v384, %v383
    %v396 = vpack.c.b16 %v386, %v385
    %v397 = vpack.c.b16 %v388, %v387
    %v398 = vpack.c.b16 %v390, %v389
    %407 = vmatprep.subr.bf16.mxu0 0
    %408 = vmatpush1.bf16.msra.mxu0 %v398
    %409 = vmatprep.subr.bf16.mxu0 0
    %410 = vmatpush1.bf16.msra.mxu0 %v397
    %411 = vmatprep.subr.bf16.mxu0 0
    %412 = vmatpush1.bf16.msra.mxu0 %v396
    %413 = vmatprep.subr.bf16.mxu0 0
    %414 = vmatpush1.bf16.msra.mxu0 %v395
    %415 = vmatprep.subr.bf16.mxu0 0
    %416 = vmatpush1.bf16.msra.mxu0 %v394
    %417 = vmatprep.subr.bf16.mxu0 0
    %418 = vmatpush1.bf16.msra.mxu0 %v393
    %419 = vmatprep.subr.bf16.mxu0 0
    %420 = vmatpush1.bf16.msra.mxu0 %v392
    %421 = vmatprep.subr.bf16.mxu0 0
    %422 = vmatpush1.bf16.msra.mxu0 %v391
    %423 = vmatprep.subr.bf16.mxu0 0
    %424 = vmatpush2.bf16.msra.mxu0 0
    %425 = vmatprep.subr.bf16.mxu0 0
    %426 = vmatpush2.bf16.msra.mxu0 0
    %427 = vmatprep.subr.bf16.mxu0 0
    %428 = vmatpush2.bf16.msra.mxu0 0
    %429 = vmatprep.subr.bf16.mxu0 0
    %430 = vmatpush2.bf16.msra.mxu0 0
    %431 = vmatprep.subr.bf16.mxu0 0
    %432 = vmatpush2.bf16.msra.mxu0 0
    %433 = vmatprep.subr.bf16.mxu0 0
    %434 = vmatpush2.bf16.msra.mxu0 0
    %435 = vmatprep.subr.bf16.mxu0 0
    %436 = vmatpush2.bf16.msra.mxu0 0
    %437 = vmatprep.subr.bf16.mxu0 0
    %438 = vmatpush2.bf16.msra.mxu0 0
    %439 = vmatprep.mubr.bf16.mxu0 0
    %440 = vmatmul.mubr.bf16.gmra.mxu0 %v335
    %v441 = vpop.f32.mrf.mxu0
    %v442 = vadd.f32 %v357, %v441
    %v443 = vpop.f32.mrf.mxu0
    %v444 = vpop.f32.mrf.mxu0
    %v445 = vadd.f32 %v357, %v444
    %v446 = vpop.f32.mrf.mxu0
    %447 = vdwg.mxu0
    %v448 = vtanh.pop %v442
    %v449 = vtanh.pop %v445
    %v450 = vpack.c.bf16 %v449, %v448
    %v452 = vunpack.c.l.b16 %v450
    %v453 = vunpack.c.h.b16 %v450
    %v454 = vpack.c.b16 %v452, %v452
    %v455 = vpack.c.b16 %v453, %v453
    %458 = vst [vmem:[%s7] sm:$0xf] %v454
    %459 = vst [vmem:[%s7 + $0x4] sm:$0xf] %v455
    // Predicated region
    $region42: #{_actor_forward_impl.1} parent=1 // pred_check
      _
    $region43: #{_actor_forward_impl.1} parent=1 // pred_check_branch
      %461 = sbr.rel (0) target = $region45
    $region44: #{_actor_forward_impl.1} parent=1 // pred_region
      _
    $region45: #{_actor_forward_impl.1} parent=1 // pred_fallthru
      _
    // Predicated region
    $region46: #{_actor_forward_impl.1} parent=1 // pred_check
      _
    $region47: #{_actor_forward_impl.1} parent=1 // pred_check_branch
      %463 = sbr.rel (0) target = $region49
    $region48: #{_actor_forward_impl.1} parent=1 // pred_region
      _
    $region49: #{_actor_forward_impl.1} parent=1 // pred_fallthru
      _
    %464 = vsyncpa [#allocation3], 1
    %465 = vsyncpa [#allocation5], 1

</llo_original>
